<compile_context>
chip_gen: v7x
topology: tpu7x:2x2x1
jax: 0.10.0
libtpu: 0.0.40
codegen_flags: <defaults>
</compile_context>

<pallas_src>
import functools

import jax
import jax.numpy as jnp
import numpy as np
from jax.experimental import pallas as pl
from jax.experimental.pallas import tpu as pltpu


# ----------------------------- Pallas kernel --------------------------------
def _conv_in_kernel(p_ref, w_ref, o_ref, *, apply_lrelu, negative_slope, eps,
                    s_tiles, ts):
    """One (batch, spatial-tile) step: GEMM conv tile; IN(+LReLU) at last tile.

    p_ref : (1, K, TS)   bf16 im2col patches (transposed), TS on lanes
    w_ref : (Cout, K)    bf16 flattened conv weights
    o_ref : (1, Cout, S) f32 resident output block (same block across s axis)
    """
    s = pl.program_id(1)

    # Convolution tile as a matmul on the MXU, f32 accumulation, lane-dense.
    y = jnp.dot(w_ref[...], p_ref[0],
                preferred_element_type=jnp.float32)          # (Cout, TS)

    # Store the raw conv tile into its slot of the resident output block.
    # Unrolled pl.when keeps every store fully static and 128-lane aligned.
    for t in range(s_tiles):
        @pl.when(s == t)
        def _(t=t):
            o_ref[0, :, t * ts:(t + 1) * ts] = y.astype(o_ref.dtype)

    # Finalize InstanceNorm3d (affine=False, biased variance) + LeakyReLU once
    # the whole spatial extent for this batch element has been produced.
    @pl.when(s == s_tiles - 1)
    def _():
        yf = o_ref[0].astype(jnp.float32)                    # (Cout, S)
        mean = jnp.mean(yf, axis=-1, keepdims=True)          # (Cout, 1)
        var = jnp.mean((yf - mean) * (yf - mean), axis=-1, keepdims=True)
        out = (yf - mean) * jax.lax.rsqrt(var + eps)
        if apply_lrelu:
            out = jnp.where(out >= 0, out, negative_slope * out)
        o_ref[0] = out.astype(o_ref.dtype)


# ------------------------------- host glue ----------------------------------
def _im2col_3d_T(xp, ksize):
    """xp: (N, C, Dp, Hp, Wp) padded input -> (N, K, S) transposed patches.

    K ordering (Cin, kd, kh, kw) matches PyTorch Conv3d weight flattening,
    S ordering is row-major (d, h, w).  No host-side transpose is required.
    """
    kd, kh, kw = ksize
    n, c, dp, hp, wp = xp.shape
    d, h, w = dp - kd + 1, hp - kh + 1, wp - kw + 1
    cols = []
    for i in range(kd):
        for j in range(kh):
            for k in range(kw):
                cols.append(xp[:, :, i:i + d, j:j + h, k:k + w])
    cols = jnp.stack(cols, axis=2)                 # (N, C, kd*kh*kw, D, H, W)
    return cols.reshape(n, c * kd * kh * kw, d * h * w)      # (N, K, S)


def _conv_in_stage(x, weight, *, apply_lrelu, ts=128):
    """Conv3d(stride=1, replicate padding) + InstanceNorm3d (+ LeakyReLU)."""
    n, cin, d, h, w = x.shape
    cout, cin_w, kd, kh, kw = weight.shape
    assert cin == cin_w
    pd, ph, pw = kd // 2, kh // 2, kw // 2
    s = d * h * w
    k = cin * kd * kh * kw

    # replicate (edge) padding + im2col as XLA glue, bf16 to halve DMA bytes
    xp = jnp.pad(x.astype(jnp.bfloat16),
                 ((0, 0), (0, 0), (pd, pd), (ph, ph), (pw, pw)), mode="edge")
    patches = _im2col_3d_T(xp, (kd, kh, kw))                  # (N, K, S) bf16
    w_mat = weight.reshape(cout, k).astype(jnp.bfloat16)      # (Cout, K) bf16

    ts = ts if s % ts == 0 else s                             # spatial tile
    s_tiles = s // ts

    kern = functools.partial(_conv_in_kernel, apply_lrelu=apply_lrelu,
                             negative_slope=0.1, eps=1e-5,
                             s_tiles=s_tiles, ts=ts)

    cost = pl.CostEstimate(
        flops=2 * n * s * k * cout,
        transcendentals=0,
        bytes_accessed=n * k * s * 2 + cout * k * 2 + n * cout * s * 4)

    out = pl.pallas_call(
        kern,
        out_shape=jax.ShapeDtypeStruct((n, cout, s), jnp.float32),
        grid=(n, s_tiles),
        in_specs=[
            pl.BlockSpec((1, k, ts), lambda i, t: (i, 0, t)),   # patches tile
            pl.BlockSpec((cout, k), lambda i, t: (0, 0)),       # weights
        ],
        out_specs=pl.BlockSpec((1, cout, s), lambda i, t: (i, 0, 0)),
        compiler_params=pltpu.CompilerParams(
            dimension_semantics=("parallel", "arbitrary"),
            vmem_limit_bytes=32 * 1024 * 1024),
        cost_estimate=cost,
    )(patches, w_mat)

    # lane-dense (N, Cout, S) -> (N, Cout, D, H, W): free reshape, no transpose
    return out.reshape(n, cout, d, h, w)


def conv_block(x, w1, b1, w2, b2):
    """Forward pass of ConvBlock.  x: (N, Cin, D, H, W) float32.

    b1/b2 are accepted for API parity but unused: InstanceNorm(affine=False)
    cancels the conv bias exactly, so the bias add is dead work.
    """
    del b1, b2
    y = _conv_in_stage(x, w1, apply_lrelu=True)    # conv1 + IN + LeakyReLU
    y = _conv_in_stage(y, w2, apply_lrelu=False)   # conv2 + IN
    return y


# --------------------------- pure-JAX reference ------------------------------
def _ref_conv3d(x, weight, bias, pad):
    xp = jnp.pad(x, ((0, 0), (0, 0), (pad[0], pad[0]), (pad[1], pad[1]),
                     (pad[2], pad[2])), mode="edge")
    y = jax.lax.conv_general_dilated(
        xp, weight, window_strides=(1, 1, 1), padding="VALID",
        dimension_numbers=("NCDHW", "OIDHW", "NCDHW"),
        precision=jax.lax.Precision.HIGHEST)
    return y + bias[None, :, None, None, None]


def _ref_instance_norm(x, eps=1e-5):
    mean = jnp.mean(x, axis=(2, 3, 4), keepdims=True)
    var = jnp.mean((x - mean) ** 2, axis=(2, 3, 4), keepdims=True)
    return (x - mean) * jax.lax.rsqrt(var + eps)


def conv_block_ref(x, w1, b1, w2, b2):
    y = _ref_conv3d(x, w1, b1, (2, 2, 1))
    y = _ref_instance_norm(y)
    y = jnp.where(y >= 0, y, 0.1 * y)
    y = _ref_conv3d(y, w2, b2, (2, 2, 1))
    y = _ref_instance_norm(y)
    return y


# ---------------------------------- main -------------------------------------
if __name__ == "__main__":
    N, Cin, Cout = 2, 4, 8
    D, H, W = 8, 8, 8
    ksize = (5, 5, 3)

    key = jax.random.PRNGKey(0)
    kx, kw1, kb1, kw2, kb2 = jax.random.split(key, 5)

    x = jax.random.normal(kx, (N, Cin, D, H, W), dtype=jnp.float32)

    fan_in = Cin * np.prod(ksize)
    bound = 1.0 / np.sqrt(fan_in)
    w1 = jax.random.uniform(kw1, (Cin, Cin) + ksize, jnp.float32, -bound, bound)
    b1 = jax.random.uniform(kb1, (Cin,), jnp.float32, -bound, bound)
    w2 = jax.random.uniform(kw2, (Cout, Cin) + ksize, jnp.float32, -bound, bound)
    b2 = jax.random.uniform(kb2, (Cout,), jnp.float32, -bound, bound)

    out = jax.block_until_ready(conv_block(x, w1, b1, w2, b2))
    ref = jax.block_until_ready(conv_block_ref(x, w1, b1, w2, b2))

    assert out.shape == (N, Cout, D, H, W), out.shape
    # Loose tolerance is intentional: the Pallas GEMM uses bf16 MXU operands
    # (f32 accumulation) while the reference runs f32 at Precision.HIGHEST.
    np.testing.assert_allclose(np.asarray(out), np.asarray(ref),
                               rtol=5e-2, atol=5e-2)
    print("KERNEL_OK")
</pallas_src>

<mosaic_0001>
module attributes {stable_mosaic.version = 11 : i64} {
  func.func @_conv_in_kernel(%arg0: i32, %arg1: i32, %arg2: memref<1x300x128xbf16, #tpu.memory_space<vmem>>, %arg3: memref<4x300xbf16, #tpu.memory_space<vmem>>, %arg4: memref<1x4x512xf32, #tpu.memory_space<vmem>>) attributes {dimension_semantics = [#tpu.dimension_semantics<parallel>, #tpu.dimension_semantics<arbitrary>], iteration_bounds = array<i64: 2, 4>, scalar_prefetch = 0 : i64, scratch_operands = 0 : i64, tpu.core_type = #tpu.core_type<tc>, window_params = [{transform_indices = @transform_0, window_bounds = array<i64: 1, 300, 128>}, {pipeline_mode = #tpu.pipeline_mode<synchronous>, transform_indices = @transform_1, window_bounds = array<i64: 4, 300>}, {transform_indices = @transform_2, window_bounds = array<i64: 1, 4, 512>}]} {
    %c0 = arith.constant 0 : index
    %c0_0 = arith.constant 0 : index
    %0 = vector.load %arg3[%c0, %c0_0] : memref<4x300xbf16, #tpu.memory_space<vmem>>, vector<4x300xbf16>
    %c0_1 = arith.constant 0 : index
    %c0_2 = arith.constant 0 : index
    %c0_3 = arith.constant 0 : index
    %1 = vector.load %arg2[%c0_1, %c0_2, %c0_3] : memref<1x300x128xbf16, #tpu.memory_space<vmem>>, vector<1x300x128xbf16>
    %2 = vector.shape_cast %1 : vector<1x300x128xbf16> to vector<300x128xbf16>
    %cst = arith.constant dense<0.000000e+00> : vector<4x128xf32>
    %3 = tpu.matmul %0, %2, %cst {dimension_numbers = #tpu.dot_dimension_numbers<[1], [0], [0], [1], [0, 0, 1, 1], [], []>} : vector<4x300xbf16>, vector<300x128xbf16>, vector<4x128xf32> -> vector<4x128xf32>
    %c0_i32 = arith.constant 0 : i32
    %4 = arith.cmpi eq, %arg1, %c0_i32 : i32
    %5 = arith.extui %4 : i1 to i32
    %c0_i32_4 = arith.constant 0 : i32
    %6 = arith.cmpi ne, %5, %c0_i32_4 : i32
    scf.if %6 {
      %c0_10 = arith.constant 0 : index
      %c0_11 = arith.constant 0 : index
      %c0_12 = arith.constant 0 : index
      %19 = vector.load %arg4[%c0_10, %c0_11, %c0_12] : memref<1x4x512xf32, #tpu.memory_space<vmem>>, vector<1x4x128xf32>
      %20 = vector.shape_cast %19 : vector<1x4x128xf32> to vector<4x128xf32>
      %21 = vector.shape_cast %3 : vector<4x128xf32> to vector<1x4x128xf32>
      tpu.vector_store %arg4[%c0_10, %c0_11, %c0_12], %21 {strides = array<i32>} : memref<1x4x512xf32, #tpu.memory_space<vmem>>, vector<1x4x128xf32>,
    } else {
    }
    %c1_i32 = arith.constant 1 : i32
    %7 = arith.cmpi eq, %arg1, %c1_i32 : i32
    %8 = arith.extui %7 : i1 to i32
    %c0_i32_5 = arith.constant 0 : i32
    %9 = arith.cmpi ne, %8, %c0_i32_5 : i32
    scf.if %9 {
      %c0_10 = arith.constant 0 : index
      %c0_11 = arith.constant 0 : index
      %c128 = arith.constant 128 : index
      %19 = vector.load %arg4[%c0_10, %c0_11, %c128] : memref<1x4x512xf32, #tpu.memory_space<vmem>>, vector<1x4x128xf32>
      %20 = vector.shape_cast %19 : vector<1x4x128xf32> to vector<4x128xf32>
      %21 = vector.shape_cast %3 : vector<4x128xf32> to vector<1x4x128xf32>
      tpu.vector_store %arg4[%c0_10, %c0_11, %c128], %21 {strides = array<i32>} : memref<1x4x512xf32, #tpu.memory_space<vmem>>, vector<1x4x128xf32>,
    } else {
    }
    %c2_i32 = arith.constant 2 : i32
    %10 = arith.cmpi eq, %arg1, %c2_i32 : i32
    %11 = arith.extui %10 : i1 to i32
    %c0_i32_6 = arith.constant 0 : i32
    %12 = arith.cmpi ne, %11, %c0_i32_6 : i32
    scf.if %12 {
      %c0_10 = arith.constant 0 : index
      %c0_11 = arith.constant 0 : index
      %c256 = arith.constant 256 : index
      %19 = vector.load %arg4[%c0_10, %c0_11, %c256] : memref<1x4x512xf32, #tpu.memory_space<vmem>>, vector<1x4x128xf32>
      %20 = vector.shape_cast %19 : vector<1x4x128xf32> to vector<4x128xf32>
      %21 = vector.shape_cast %3 : vector<4x128xf32> to vector<1x4x128xf32>
      tpu.vector_store %arg4[%c0_10, %c0_11, %c256], %21 {strides = array<i32>} : memref<1x4x512xf32, #tpu.memory_space<vmem>>, vector<1x4x128xf32>,
    } else {
    }
    %c3_i32 = arith.constant 3 : i32
    %13 = arith.cmpi eq, %arg1, %c3_i32 : i32
    %14 = arith.extui %13 : i1 to i32
    %c0_i32_7 = arith.constant 0 : i32
    %15 = arith.cmpi ne, %14, %c0_i32_7 : i32
    scf.if %15 {
      %c0_10 = arith.constant 0 : index
      %c0_11 = arith.constant 0 : index
      %c384 = arith.constant 384 : index
      %19 = vector.load %arg4[%c0_10, %c0_11, %c384] : memref<1x4x512xf32, #tpu.memory_space<vmem>>, vector<1x4x128xf32>
      %20 = vector.shape_cast %19 : vector<1x4x128xf32> to vector<4x128xf32>
      %21 = vector.shape_cast %3 : vector<4x128xf32> to vector<1x4x128xf32>
      tpu.vector_store %arg4[%c0_10, %c0_11, %c384], %21 {strides = array<i32>} : memref<1x4x512xf32, #tpu.memory_space<vmem>>, vector<1x4x128xf32>,
    } else {
    }
    %c3_i32_8 = arith.constant 3 : i32
    %16 = arith.cmpi eq, %arg1, %c3_i32_8 : i32
    %17 = arith.extui %16 : i1 to i32
    %c0_i32_9 = arith.constant 0 : i32
    %18 = arith.cmpi ne, %17, %c0_i32_9 : i32
    scf.if %18 {
      %c0_10 = arith.constant 0 : index
      %c0_11 = arith.constant 0 : index
      %c0_12 = arith.constant 0 : index
      %19 = vector.load %arg4[%c0_10, %c0_11, %c0_12] : memref<1x4x512xf32, #tpu.memory_space<vmem>>, vector<1x4x512xf32>
      %20 = vector.shape_cast %19 : vector<1x4x512xf32> to vector<4x512xf32>
      %cst_13 = arith.constant dense<0.000000e+00> : vector<4xf32>
      %21 = vector.multi_reduction <add>, %20, %cst_13 [1] : vector<4x512xf32> to vector<4xf32>
      %22 = vector.shape_cast %21 : vector<4xf32> to vector<4x1xf32>
      %cst_14 = arith.constant 5.120000e+02 : f32
      %23 = vector.broadcast %cst_14 : f32 to vector<4x1xf32>
      %24 = arith.divf %22, %23 : vector<4x1xf32>
      %25 = vector.broadcast %24 : vector<4x1xf32> to vector<4x512xf32>
      %26 = arith.subf %20, %25 : vector<4x512xf32>
      %27 = vector.broadcast %24 : vector<4x1xf32> to vector<4x512xf32>
      %28 = arith.subf %20, %27 : vector<4x512xf32>
      %29 = arith.mulf %26, %28 : vector<4x512xf32>
      %cst_15 = arith.constant dense<0.000000e+00> : vector<4xf32>
      %30 = vector.multi_reduction <add>, %29, %cst_15 [1] : vector<4x512xf32> to vector<4xf32>
      %31 = vector.shape_cast %30 : vector<4xf32> to vector<4x1xf32>
      %cst_16 = arith.constant 5.120000e+02 : f32
      %32 = vector.broadcast %cst_16 : f32 to vector<4x1xf32>
      %33 = arith.divf %31, %32 : vector<4x1xf32>
      %34 = vector.broadcast %24 : vector<4x1xf32> to vector<4x512xf32>
      %35 = arith.subf %20, %34 : vector<4x512xf32>
      %cst_17 = arith.constant 9.99999974E-6 : f32
      %36 = vector.broadcast %cst_17 : f32 to vector<4x1xf32>
      %37 = arith.addf %33, %36 : vector<4x1xf32>
      %38 = math.rsqrt %37 : vector<4x1xf32>
      %39 = vector.broadcast %38 : vector<4x1xf32> to vector<4x512xf32>
      %40 = arith.mulf %35, %39 : vector<4x512xf32>
      %cst_18 = arith.constant 0.000000e+00 : f32
      %41 = vector.broadcast %cst_18 : f32 to vector<4x512xf32>
      %42 = arith.cmpf oge, %40, %41 : vector<4x512xf32>
      %cst_19 = arith.constant 1.000000e-01 : f32
      %43 = vector.broadcast %cst_19 : f32 to vector<4x512xf32>
      %44 = arith.mulf %43, %40 : vector<4x512xf32>
      %45 = arith.select %42, %40, %44 : vector<4x512xi1>, vector<4x512xf32>
      %c0_20 = arith.constant 0 : index
      %c0_21 = arith.constant 0 : index
      %c0_22 = arith.constant 0 : index
      %46 = vector.load %arg4[%c0_20, %c0_21, %c0_22] : memref<1x4x512xf32, #tpu.memory_space<vmem>>, vector<1x4x512xf32>
      %47 = vector.shape_cast %46 : vector<1x4x512xf32> to vector<4x512xf32>
      %48 = vector.shape_cast %45 : vector<4x512xf32> to vector<1x4x512xf32>
      tpu.vector_store %arg4[%c0_20, %c0_21, %c0_22], %48 {strides = array<i32>} : memref<1x4x512xf32, #tpu.memory_space<vmem>>, vector<1x4x512xf32>,
    } else {
    }
    return
  }
  func.func @transform_0(%arg0: i32, %arg1: i32) -> (i32, i32, i32) {
    %c0_i32 = arith.constant 0 : i32
    %c0_i32_0 = arith.constant 0 : i32
    return %arg0, %c0_i32, %arg1 : i32, i32, i32
  }
  func.func @transform_1(%arg0: i32, %arg1: i32) -> (i32, i32) {
    %c0_i32 = arith.constant 0 : i32
    %c0_i32_0 = arith.constant 0 : i32
    %c0_i32_1 = arith.constant 0 : i32
    return %c0_i32, %c0_i32_0 : i32, i32
  }
  func.func @transform_2(%arg0: i32, %arg1: i32) -> (i32, i32, i32) {
    %c0_i32 = arith.constant 0 : i32
    %c0_i32_0 = arith.constant 0 : i32
    %c0_i32_1 = arith.constant 0 : i32
    return %arg0, %c0_i32, %c0_i32_0 : i32, i32, i32
  }
}

</mosaic_0001>

<llo_original>
// kernel: tpu_custom_call.1
$region0: #{tpu_custom_call.1}
  #allocation0 [shape = 'u32[]', space=smem, size = 0x4, offset = 0x4, fixed_abs, tag = 'smem constant byte address 0x4 - core index']
  #allocation1 [shape = 'u32[144,128]{1,0:T(1,128)}', space=vmem, size = 0x12000, scoped, tag = 'internal scratch']
  %s0 = inlined_call_operand.vmem [shape: bf16[2,300,512], index: 0, kind: input, shape index: {}]
  %s1 = inlined_call_operand.vmem [shape: bf16[4,300], index: 1, kind: input, shape index: {}]
  %s2 = inlined_call_operand.hbm [shape: f32[2,4,512], index: 2, kind: output, shape index: {}]
  %s3 = sld [smem:[#allocation0]]
  $region98: #{tpu_custom_call.1} parent=0
    _
  %s5 = ssub.s32 1, %s3
  %s6 = scalar_select 0, %s5, %s3
  $region1: #{tpu_custom_call.1} parent=0
    #allocation2 [shape = 'u8[155648]{0}', space=vmem, size = 0x26000, scoped, tag = 'input window, operand 0']
    #allocation3 [shape = 'u8[16384]{0}', space=vmem, size = 0x4000, scoped, tag = 'output window, operand 0']
    #allocation4 [shape = 's32[2]{0}', space=sflag, size = 0x8, scoped, tag = 'scoped memory for tpu_custom_call.1']
    %7 = vsyncpa [#allocation4], 0
    %s8 = scalar_lea.sflag [#allocation4], 1
    %9 = vsyncpa %s8, 0
    loop: start=0, step=1, limit=10
    $region2: #{tpu_custom_call.1} parent=1 // loop_pre_header
      _
    $region3: #{tpu_custom_call.1} parent=1 // loop_header
      %s11 = sphi 0, %s15
      %p12 = scmp.ge.s32.totalorder %s11, 10
      %s18 = sphi 0, %s30
      %s19 = sphi 0, %s26
      %s20 = sphi 0, %s18
      %s21 = sphi 0, %s19
      %s22 = sphi 0, %s20
      %s23 = sphi 0, %s21
      %s35 = sphi 0, %s37
      %s38 = sphi 0, %s35
      %s39 = sphi 0, %s38
      %s55 = sphi 0, %s39
      %s59 = sphi 0, %s59
      %s61 = sphi 0, %s59
      %s62 = sphi 0, %s61
      %s76 = sphi 0, %s62
      %s82 = sphi 0, %s84
      %s85 = sphi 0, %s82
      %s86 = sphi 0, %s85
      %s102 = sphi 0, %s86
    $region4: #{tpu_custom_call.1} parent=1 // loop_header_branch
      %14 = sbr.rel (%p12) target = $region8
    $region5: #{tpu_custom_call.1} parent=1 // loop_body
      %s16 = ssub.s32 %s11, 1
      %s17 = ssub.s32 %s11, 2
      %s24 = sadd.s32 1, %s19
      %p25 = scmp.ge.s32.totalorder %s24, 4
      %s26 = scalar_select %p25, 0, %s24
      %s27 = sadd.s32 1, %s18
      %s28 = scalar_select %p25, %s27, %s18
      %p29 = scmp.ge.s32.totalorder %s28, 2
      %s30 = scalar_select %p29, 0, %s28
      %s31 = ssub.s32 %s18, %s30
      %s32 = ssub.s32 %s19, %s26
      %s33 = sor.u32 %s31, %s32
      %p34 = scmp.eq.s32.totalorder %s33, 0
      %s36 = sadd.s32 %s35, 1
      %s37 = scalar_select %p34, %s35, %s36
      %p40 = pneg %p34
      %p41 = scmp.eq.s32.totalorder %s11, 7
      %p42 = por %p40, %p41
      %p43 = scmp.ne.s32.totalorder %s35, %s38
      %p44 = scmp.eq.s32.totalorder %s11, 0
      %p45 = por %p43, %p44
      %p46 = scmp.ne.s32.totalorder %s35, %s38
      %p47 = scmp.eq.s32.totalorder %s16, 7
      %p48 = por %p46, %p47
      %p49 = scmp.ne.s32.totalorder %s38, %s39
      %p50 = scmp.eq.s32.totalorder %s16, 0
      %p51 = por %p49, %p50
      %p52 = scmp.ne.s32.totalorder %s38, %s39
      %p53 = scmp.eq.s32.totalorder %s17, 7
      %p54 = por %p52, %p53
      %p56 = scmp.ne.s32.totalorder %s39, %s55
      %p57 = scmp.eq.s32.totalorder %s17, 0
      %p58 = por %p56, %p57
      %s60 = sadd.s32 %s59, 1
      %p63 = scmp.eq.s32.totalorder %s11, 7
      %p64 = scmp.ne.s32.totalorder %s59, %s61
      %p65 = scmp.eq.s32.totalorder %s11, 0
      %p66 = por %p64, %p65
      %p67 = scmp.ne.s32.totalorder %s59, %s61
      %p68 = scmp.eq.s32.totalorder %s16, 7
      %p69 = por %p67, %p68
      %p70 = scmp.ne.s32.totalorder %s61, %s62
      %p71 = scmp.eq.s32.totalorder %s16, 0
      %p72 = por %p70, %p71
      %p73 = scmp.ne.s32.totalorder %s61, %s62
      %p74 = scmp.eq.s32.totalorder %s17, 7
      %p75 = por %p73, %p74
      %p77 = scmp.ne.s32.totalorder %s62, %s76
      %p78 = scmp.eq.s32.totalorder %s17, 0
      %p79 = por %p77, %p78
      %s80 = ssub.s32 %s18, %s30
      %p81 = scmp.eq.s32.totalorder %s80, 0
      %s83 = sadd.s32 %s82, 1
      %s84 = scalar_select %p81, %s82, %s83
      %p87 = pneg %p81
      %p88 = scmp.eq.s32.totalorder %s11, 7
      %p89 = por %p87, %p88
      %p90 = scmp.ne.s32.totalorder %s82, %s85
      %p91 = scmp.eq.s32.totalorder %s11, 0
      %p92 = por %p90, %p91
      %p93 = scmp.ne.s32.totalorder %s82, %s85
      %p94 = scmp.eq.s32.totalorder %s16, 7
      %p95 = por %p93, %p94
      %p96 = scmp.ne.s32.totalorder %s85, %s86
      %p97 = scmp.eq.s32.totalorder %s16, 0
      %p98 = por %p96, %p97
      %p99 = scmp.ne.s32.totalorder %s85, %s86
      %p100 = scmp.eq.s32.totalorder %s17, 7
      %p101 = por %p99, %p100
      %p103 = scmp.ne.s32.totalorder %s86, %s102
      %p104 = scmp.eq.s32.totalorder %s17, 0
      %p105 = por %p103, %p104
      %p106 = scmp.le.s32.totalorder 1, %s11
      %p107 = scmp.lt.s32.totalorder %s11, 9
      %p108 = pnand %p106, %p107
      %p109 = pneg %p108
      // Predicated region
      $region9: #{tpu_custom_call.1} parent=5 // pred_check
        _
      $region10: #{tpu_custom_call.1} parent=5 // pred_check_branch
        %111 = sbr.rel (%p108) target = $region12
      $region11: #{tpu_custom_call.1} parent=5 // pred_region
        %s112 = ssub.s32 %s11, 1
        // Predicated region
        $region13: #{tpu_custom_call.1} parent=11 // pred_check
          %p113 = pneg %p72
        $region14: #{tpu_custom_call.1} parent=11 // pred_check_branch
          %115 = sbr.rel (%p113) target = $region16
        $region15: #{tpu_custom_call.1} parent=11 // pred_region
          _
        $region16: #{tpu_custom_call.1} parent=11 // pred_fallthru
          _
      $region12: #{tpu_custom_call.1} parent=5 // pred_fallthru
        _
      %p116 = scmp.lt.s32.totalorder %s11, 8
      // Predicated region
      $region17: #{tpu_custom_call.1} parent=5 // pred_check
        %p117 = pneg %p116
      $region18: #{tpu_custom_call.1} parent=5 // pred_check_branch
        %119 = sbr.rel (%p117) target = $region20
      $region19: #{tpu_custom_call.1} parent=5 // pred_region
        // Predicated region
        $region21: #{tpu_custom_call.1} parent=19 // pred_check
          %p120 = pneg %p45
        $region22: #{tpu_custom_call.1} parent=19 // pred_check_branch
          %122 = sbr.rel (%p120) target = $region24
        $region23: #{tpu_custom_call.1} parent=19 // pred_region
          %s123 = sand.u32 %s35, 1
          %s124 = sand.u32 %s35, 1
          %s125 = smul.addr %s124, 152
          %s126 = scalar_lea.vmem [#allocation2], %s125
          %s127 = smul.addr %s18, 152
          %s128 = sadd.s32 %s19, %s127
          %s129 = smul.addr %s128, 4
          %s130 = scalar_lea.vmem %s0, %s129
          // Predicated region
          $region25: #{tpu_custom_call.1} parent=23 // pred_check
            _
          $region26: #{tpu_custom_call.1} parent=23 // pred_check_branch
            %132 = sbr.rel (0) target = $region28
          $region27: #{tpu_custom_call.1} parent=23 // pred_region
            // Predicated region
            $region29: #{tpu_custom_call.1} parent=27 // pred_check
              _
            $region30: #{tpu_custom_call.1} parent=27 // pred_check_branch
              %134 = sbr.rel target = $region32
            $region31: #{tpu_custom_call.1} parent=27 // pred_region
              // Predicated region
              $region44: #{tpu_custom_call.1} parent=31 // pred_check
                _
              $region45: #{tpu_custom_call.1} parent=31 // pred_check_branch
                %223 = sbr.rel (0) target = $region47
              $region46: #{tpu_custom_call.1} parent=31 // pred_region
                loop: start=0, step=1, limit=1
                $region48: #{tpu_custom_call.1} parent=46 // loop_pre_header
                  _
                $region49: #{tpu_custom_call.1} parent=46 // loop_header
                  %s225 = sphi 0, %s229
                  %p226 = scmp.ge.s32.totalorder %s225, 1
                  %s230 = sphi %s130, %s130
                  %s231 = sphi %s126, %s126
                $region50: #{tpu_custom_call.1} parent=46 // loop_header_branch
                  %228 = sbr.rel (%p226) target = $region54
                $region51: #{tpu_custom_call.1} parent=46 // loop_body
                  _
                $region52: #{tpu_custom_call.1} parent=46 // loop_footer
                  %s229 = sadd.s32 1, %s225
                $region53: #{tpu_custom_call.1} parent=46 // loop_footer_branch
                  %224 = sbr.rel target = $region49
                $region54: #{tpu_custom_call.1} parent=46 // loop_exit
                  _
                loop: start=0, step=1, limit=1
                $region55: #{tpu_custom_call.1} parent=46 // loop_pre_header
                  _
                $region56: #{tpu_custom_call.1} parent=46 // loop_header
                  %s234 = sphi 0, %s238
                  %p235 = scmp.ge.s32.totalorder %s234, 1
                  %s239 = sphi %s130, %s130
                  %s240 = sphi %s126, %s126
                $region57: #{tpu_custom_call.1} parent=46 // loop_header_branch
                  %237 = sbr.rel (%p235) target = $region61
                $region58: #{tpu_custom_call.1} parent=46 // loop_body
                  %v241 = vld [vmem:[%s239] sm:$0xf]
                  %242 = vst [vmem:[%s240] sm:$0xf] %v241
                  %v243 = vld [vmem:[%s239 + $0x10] sm:$0xf]
                  %244 = vst [vmem:[%s240 + $0x4] sm:$0xf] %v243
                  %v245 = vld [vmem:[%s239 + $0x20] sm:$0xf]
                  %246 = vst [vmem:[%s240 + $0x8] sm:$0xf] %v245
                  %v247 = vld [vmem:[%s239 + $0x30] sm:$0xf]
                  %248 = vst [vmem:[%s240 + $0xc] sm:$0xf] %v247
                  %v249 = vld [vmem:[%s239 + $0x40] sm:$0xf]
                  %250 = vst [vmem:[%s240 + $0x10] sm:$0xf] %v249
                  %v251 = vld [vmem:[%s239 + $0x50] sm:$0xf]
                  %252 = vst [vmem:[%s240 + $0x14] sm:$0xf] %v251
                  %v253 = vld [vmem:[%s239 + $0x60] sm:$0xf]
                  %254 = vst [vmem:[%s240 + $0x18] sm:$0xf] %v253
                  %v255 = vld [vmem:[%s239 + $0x70] sm:$0xf]
                  %256 = vst [vmem:[%s240 + $0x1c] sm:$0xf] %v255
                  %v257 = vld [vmem:[%s239 + $0x80] sm:$0xf]
                  %258 = vst [vmem:[%s240 + $0x20] sm:$0xf] %v257
                  %v259 = vld [vmem:[%s239 + $0x90] sm:$0xf]
                  %260 = vst [vmem:[%s240 + $0x24] sm:$0xf] %v259
                  %v261 = vld [vmem:[%s239 + $0xa0] sm:$0xf]
                  %262 = vst [vmem:[%s240 + $0x28] sm:$0xf] %v261
                  %v263 = vld [vmem:[%s239 + $0xb0] sm:$0xf]
                  %264 = vst [vmem:[%s240 + $0x2c] sm:$0xf] %v263
                  %v265 = vld [vmem:[%s239 + $0xc0] sm:$0xf]
                  %266 = vst [vmem:[%s240 + $0x30] sm:$0xf] %v265
                  %v267 = vld [vmem:[%s239 + $0xd0] sm:$0xf]
                  %268 = vst [vmem:[%s240 + $0x34] sm:$0xf] %v267
                  %v269 = vld [vmem:[%s239 + $0xe0] sm:$0xf]
                  %270 = vst [vmem:[%s240 + $0x38] sm:$0xf] %v269
                  %v271 = vld [vmem:[%s239 + $0xf0] sm:$0xf]
                  %272 = vst [vmem:[%s240 + $0x3c] sm:$0xf] %v271
                  %v273 = vld [vmem:[%s239 + $0x100] sm:$0xf]
                  %274 = vst [vmem:[%s240 + $0x40] sm:$0xf] %v273
                  %v275 = vld [vmem:[%s239 + $0x110] sm:$0xf]
                  %276 = vst [vmem:[%s240 + $0x44] sm:$0xf] %v275
                  %v277 = vld [vmem:[%s239 + $0x120] sm:$0xf]
                  %278 = vst [vmem:[%s240 + $0x48] sm:$0xf] %v277
                  %v279 = vld [vmem:[%s239 + $0x130] sm:$0xf]
                  %280 = vst [vmem:[%s240 + $0x4c] sm:$0xf] %v279
                  %v281 = vld [vmem:[%s239 + $0x140] sm:$0xf]
                  %282 = vst [vmem:[%s240 + $0x50] sm:$0xf] %v281
                  %v283 = vld [vmem:[%s239 + $0x150] sm:$0xf]
                  %284 = vst [vmem:[%s240 + $0x54] sm:$0xf] %v283
                  %v285 = vld [vmem:[%s239 + $0x160] sm:$0xf]
                  %286 = vst [vmem:[%s240 + $0x58] sm:$0xf] %v285
                  %v287 = vld [vmem:[%s239 + $0x170] sm:$0xf]
                  %288 = vst [vmem:[%s240 + $0x5c] sm:$0xf] %v287
                  %v289 = vld [vmem:[%s239 + $0x180] sm:$0xf]
                  %290 = vst [vmem:[%s240 + $0x60] sm:$0xf] %v289
                  %v291 = vld [vmem:[%s239 + $0x190] sm:$0xf]
                  %292 = vst [vmem:[%s240 + $0x64] sm:$0xf] %v291
                  %v293 = vld [vmem:[%s239 + $0x1a0] sm:$0xf]
                  %294 = vst [vmem:[%s240 + $0x68] sm:$0xf] %v293
                  %v295 = vld [vmem:[%s239 + $0x1b0] sm:$0xf]
                  %296 = vst [vmem:[%s240 + $0x6c] sm:$0xf] %v295
                  %v297 = vld [vmem:[%s239 + $0x1c0] sm:$0xf]
                  %298 = vst [vmem:[%s240 + $0x70] sm:$0xf] %v297
                  %v299 = vld [vmem:[%s239 + $0x1d0] sm:$0xf]
                  %300 = vst [vmem:[%s240 + $0x74] sm:$0xf] %v299
                  %v301 = vld [vmem:[%s239 + $0x1e0] sm:$0xf]
                  %302 = vst [vmem:[%s240 + $0x78] sm:$0xf] %v301
                  %v303 = vld [vmem:[%s239 + $0x1f0] sm:$0xf]
                  %304 = vst [vmem:[%s240 + $0x7c] sm:$0xf] %v303
                  %v305 = vld [vmem:[%s239 + $0x200] sm:$0xf]
                  %306 = vst [vmem:[%s240 + $0x80] sm:$0xf] %v305
                  %v307 = vld [vmem:[%s239 + $0x210] sm:$0xf]
                  %308 = vst [vmem:[%s240 + $0x84] sm:$0xf] %v307
                  %v309 = vld [vmem:[%s239 + $0x220] sm:$0xf]
                  %310 = vst [vmem:[%s240 + $0x88] sm:$0xf] %v309
                  %v311 = vld [vmem:[%s239 + $0x230] sm:$0xf]
                  %312 = vst [vmem:[%s240 + $0x8c] sm:$0xf] %v311
                  %v313 = vld [vmem:[%s239 + $0x240] sm:$0xf]
                  %314 = vst [vmem:[%s240 + $0x90] sm:$0xf] %v313
                  %v315 = vld [vmem:[%s239 + $0x250] sm:$0xf]
                  %316 = vst [vmem:[%s240 + $0x94] sm:$0xf] %v315
                $region59: #{tpu_custom_call.1} parent=46 // loop_footer
                  %s238 = sadd.s32 1, %s234
                $region60: #{tpu_custom_call.1} parent=46 // loop_footer_branch
                  %233 = sbr.rel target = $region56
                $region61: #{tpu_custom_call.1} parent=46 // loop_exit
                  _
              $region47: #{tpu_custom_call.1} parent=31 // pred_fallthru
                _
            $region32: #{tpu_custom_call.1} parent=27 // pred_fallthru
              _
            // Predicated region
            $region33: #{tpu_custom_call.1} parent=27 // pred_check
              _
            $region34: #{tpu_custom_call.1} parent=27 // pred_check_branch
              %136 = sbr.rel (0) target = $region36
            $region35: #{tpu_custom_call.1} parent=27 // pred_region
              loop: start=0, step=1, limit=1
              $region37: #{tpu_custom_call.1} parent=35 // loop_pre_header
                _
              $region38: #{tpu_custom_call.1} parent=35 // loop_header
                %s139 = sphi 0, %s143
                %p140 = scmp.ge.s32.totalorder %s139, 1
                %s144 = sphi %s130, %s130
                %s145 = sphi %s126, %s126
              $region39: #{tpu_custom_call.1} parent=35 // loop_header_branch
                %142 = sbr.rel (%p140) target = $region43
              $region40: #{tpu_custom_call.1} parent=35 // loop_body
                %v146 = vld [vmem:[%s144] sm:$0xf]
                %147 = vst [vmem:[%s145] sm:$0xf] %v146
                %v148 = vld [vmem:[%s144 + $0x10] sm:$0xf]
                %149 = vst [vmem:[%s145 + $0x4] sm:$0xf] %v148
                %v150 = vld [vmem:[%s144 + $0x20] sm:$0xf]
                %151 = vst [vmem:[%s145 + $0x8] sm:$0xf] %v150
                %v152 = vld [vmem:[%s144 + $0x30] sm:$0xf]
                %153 = vst [vmem:[%s145 + $0xc] sm:$0xf] %v152
                %v154 = vld [vmem:[%s144 + $0x40] sm:$0xf]
                %155 = vst [vmem:[%s145 + $0x10] sm:$0xf] %v154
                %v156 = vld [vmem:[%s144 + $0x50] sm:$0xf]
                %157 = vst [vmem:[%s145 + $0x14] sm:$0xf] %v156
                %v158 = vld [vmem:[%s144 + $0x60] sm:$0xf]
                %159 = vst [vmem:[%s145 + $0x18] sm:$0xf] %v158
                %v160 = vld [vmem:[%s144 + $0x70] sm:$0xf]
                %161 = vst [vmem:[%s145 + $0x1c] sm:$0xf] %v160
                %v162 = vld [vmem:[%s144 + $0x80] sm:$0xf]
                %163 = vst [vmem:[%s145 + $0x20] sm:$0xf] %v162
                %v164 = vld [vmem:[%s144 + $0x90] sm:$0xf]
                %165 = vst [vmem:[%s145 + $0x24] sm:$0xf] %v164
                %v166 = vld [vmem:[%s144 + $0xa0] sm:$0xf]
                %167 = vst [vmem:[%s145 + $0x28] sm:$0xf] %v166
                %v168 = vld [vmem:[%s144 + $0xb0] sm:$0xf]
                %169 = vst [vmem:[%s145 + $0x2c] sm:$0xf] %v168
                %v170 = vld [vmem:[%s144 + $0xc0] sm:$0xf]
                %171 = vst [vmem:[%s145 + $0x30] sm:$0xf] %v170
                %v172 = vld [vmem:[%s144 + $0xd0] sm:$0xf]
                %173 = vst [vmem:[%s145 + $0x34] sm:$0xf] %v172
                %v174 = vld [vmem:[%s144 + $0xe0] sm:$0xf]
                %175 = vst [vmem:[%s145 + $0x38] sm:$0xf] %v174
                %v176 = vld [vmem:[%s144 + $0xf0] sm:$0xf]
                %177 = vst [vmem:[%s145 + $0x3c] sm:$0xf] %v176
                %v178 = vld [vmem:[%s144 + $0x100] sm:$0xf]
                %179 = vst [vmem:[%s145 + $0x40] sm:$0xf] %v178
                %v180 = vld [vmem:[%s144 + $0x110] sm:$0xf]
                %181 = vst [vmem:[%s145 + $0x44] sm:$0xf] %v180
                %v182 = vld [vmem:[%s144 + $0x120] sm:$0xf]
                %183 = vst [vmem:[%s145 + $0x48] sm:$0xf] %v182
                %v184 = vld [vmem:[%s144 + $0x130] sm:$0xf]
                %185 = vst [vmem:[%s145 + $0x4c] sm:$0xf] %v184
                %v186 = vld [vmem:[%s144 + $0x140] sm:$0xf]
                %187 = vst [vmem:[%s145 + $0x50] sm:$0xf] %v186
                %v188 = vld [vmem:[%s144 + $0x150] sm:$0xf]
                %189 = vst [vmem:[%s145 + $0x54] sm:$0xf] %v188
                %v190 = vld [vmem:[%s144 + $0x160] sm:$0xf]
                %191 = vst [vmem:[%s145 + $0x58] sm:$0xf] %v190
                %v192 = vld [vmem:[%s144 + $0x170] sm:$0xf]
                %193 = vst [vmem:[%s145 + $0x5c] sm:$0xf] %v192
                %v194 = vld [vmem:[%s144 + $0x180] sm:$0xf]
                %195 = vst [vmem:[%s145 + $0x60] sm:$0xf] %v194
                %v196 = vld [vmem:[%s144 + $0x190] sm:$0xf]
                %197 = vst [vmem:[%s145 + $0x64] sm:$0xf] %v196
                %v198 = vld [vmem:[%s144 + $0x1a0] sm:$0xf]
                %199 = vst [vmem:[%s145 + $0x68] sm:$0xf] %v198
                %v200 = vld [vmem:[%s144 + $0x1b0] sm:$0xf]
                %201 = vst [vmem:[%s145 + $0x6c] sm:$0xf] %v200
                %v202 = vld [vmem:[%s144 + $0x1c0] sm:$0xf]
                %203 = vst [vmem:[%s145 + $0x70] sm:$0xf] %v202
                %v204 = vld [vmem:[%s144 + $0x1d0] sm:$0xf]
                %205 = vst [vmem:[%s145 + $0x74] sm:$0xf] %v204
                %v206 = vld [vmem:[%s144 + $0x1e0] sm:$0xf]
                %207 = vst [vmem:[%s145 + $0x78] sm:$0xf] %v206
                %v208 = vld [vmem:[%s144 + $0x1f0] sm:$0xf]
                %209 = vst [vmem:[%s145 + $0x7c] sm:$0xf] %v208
                %v210 = vld [vmem:[%s144 + $0x200] sm:$0xf]
                %211 = vst [vmem:[%s145 + $0x80] sm:$0xf] %v210
                %v212 = vld [vmem:[%s144 + $0x210] sm:$0xf]
                %213 = vst [vmem:[%s145 + $0x84] sm:$0xf] %v212
                %v214 = vld [vmem:[%s144 + $0x220] sm:$0xf]
                %215 = vst [vmem:[%s145 + $0x88] sm:$0xf] %v214
                %v216 = vld [vmem:[%s144 + $0x230] sm:$0xf]
                %217 = vst [vmem:[%s145 + $0x8c] sm:$0xf] %v216
                %v218 = vld [vmem:[%s144 + $0x240] sm:$0xf]
                %219 = vst [vmem:[%s145 + $0x90] sm:$0xf] %v218
                %v220 = vld [vmem:[%s144 + $0x250] sm:$0xf]
                %221 = vst [vmem:[%s145 + $0x94] sm:$0xf] %v220
              $region41: #{tpu_custom_call.1} parent=35 // loop_footer
                %s143 = sadd.s32 1, %s139
              $region42: #{tpu_custom_call.1} parent=35 // loop_footer_branch
                %138 = sbr.rel target = $region38
              $region43: #{tpu_custom_call.1} parent=35 // loop_exit
                _
            $region36: #{tpu_custom_call.1} parent=27 // pred_fallthru
              _
          $region28: #{tpu_custom_call.1} parent=23 // pred_fallthru
            _
          %317 = vnop
        $region24: #{tpu_custom_call.1} parent=19 // pred_fallthru
          _
      $region20: #{tpu_custom_call.1} parent=5 // pred_fallthru
        _
      %p318 = scmp.le.s32.totalorder 1, %s11
      %p319 = scmp.lt.s32.totalorder %s11, 9
      %p320 = pnand %p318, %p319
      %p321 = pneg %p320
      // Predicated region
      $region62: #{tpu_custom_call.1} parent=5 // pred_check
        _
      $region63: #{tpu_custom_call.1} parent=5 // pred_check_branch
        %323 = sbr.rel (%p320) target = $region65
      $region64: #{tpu_custom_call.1} parent=5 // pred_region
        %s324 = ssub.s32 %s11, 1
        %s325 = sand.u32 %s38, 1
        %s326 = sand.u32 %s38, 1
        %s327 = smul.addr %s326, 152
        %s328 = scalar_lea.vmem [#allocation2], %s327
        // Predicated region
        $region66: #{tpu_custom_call.1} parent=64 // pred_check
          %p329 = pneg %p51
        $region67: #{tpu_custom_call.1} parent=64 // pred_check_branch
          %331 = sbr.rel (%p329) target = $region69
        $region68: #{tpu_custom_call.1} parent=64 // pred_region
          _
        $region69: #{tpu_custom_call.1} parent=64 // pred_fallthru
          _
        %s332 = sand.u32 %s38, 1
        %s333 = sand.u32 %s38, 1
        %s334 = smul.addr %s333, 152
        %s335 = scalar_lea.vmem [#allocation2], %s334
        %p336 = pneg %p51
        %p337 = pneg %p48
        %p338 = pneg %p72
        %p339 = pneg %p69
        %p340 = pneg %p98
        %p341 = pneg %p95
        %s342 = sand.u32 %s85, 1
        %s343 = scalar_lea.sflag [#allocation4], %s342
        %s344 = sand.u32 %s85, 1
        %s345 = smul.addr %s344, 16
        %s346 = scalar_lea.vmem [#allocation3], %s345
        %v348 = vld [vmem:[%s1] sm:$0x3f]
        %v349 = vld [vmem:[%s328] sm:$0xf]
        %v350 = vld [vmem:[%s328 + $0x4] sm:$0xf]
        %v351 = vld [vmem:[%s328 + $0x8] sm:$0xf]
        %v352 = vld [vmem:[%s328 + $0xc] sm:$0xf]
        %v353 = vld [vmem:[%s328 + $0x10] sm:$0xf]
        %v354 = vld [vmem:[%s328 + $0x14] sm:$0xf]
        %v355 = vld [vmem:[%s328 + $0x18] sm:$0xf]
        %v356 = vld [vmem:[%s328 + $0x1c] sm:$0xf]
        %v357 = vld [vmem:[%s328 + $0x20] sm:$0xf]
        %v358 = vld [vmem:[%s328 + $0x24] sm:$0xf]
        %v359 = vld [vmem:[%s328 + $0x28] sm:$0xf]
        %v360 = vld [vmem:[%s328 + $0x2c] sm:$0xf]
        %v361 = vld [vmem:[%s328 + $0x30] sm:$0xf]
        %v362 = vld [vmem:[%s328 + $0x34] sm:$0xf]
        %v363 = vld [vmem:[%s328 + $0x38] sm:$0xf]
        %v364 = vld [vmem:[%s328 + $0x3c] sm:$0xf]
        %v365 = vld [vmem:[%s328 + $0x40] sm:$0xf]
        %v366 = vld [vmem:[%s328 + $0x44] sm:$0xf]
        %v367 = vld [vmem:[%s328 + $0x48] sm:$0xf]
        %v368 = vld [vmem:[%s328 + $0x4c] sm:$0xf]
        %v369 = vld [vmem:[%s328 + $0x50] sm:$0xf]
        %v370 = vld [vmem:[%s328 + $0x54] sm:$0xf]
        %v371 = vld [vmem:[%s328 + $0x58] sm:$0xf]
        %v372 = vld [vmem:[%s328 + $0x5c] sm:$0xf]
        %v373 = vld [vmem:[%s328 + $0x60] sm:$0xf]
        %v374 = vld [vmem:[%s328 + $0x64] sm:$0xf]
        %v375 = vld [vmem:[%s328 + $0x68] sm:$0xf]
        %v376 = vld [vmem:[%s328 + $0x6c] sm:$0xf]
        %v377 = vld [vmem:[%s328 + $0x70] sm:$0xf]
        %v378 = vld [vmem:[%s328 + $0x74] sm:$0xf]
        %v379 = vld [vmem:[%s328 + $0x78] sm:$0xf]
        %v380 = vld [vmem:[%s328 + $0x7c] sm:$0xf]
        %v381 = vld [vmem:[%s328 + $0x80] sm:$0xf]
        %v382 = vld [vmem:[%s328 + $0x84] sm:$0xf]
        %v383 = vld [vmem:[%s328 + $0x88] sm:$0xf]
        %v384 = vld [vmem:[%s328 + $0x8c] sm:$0xf]
        %v385 = vld [vmem:[%s328 + $0x90] sm:$0xf]
        %v386 = vld [vmem:[%s328 + $0x94] sm:$0x3]
        %v388 = vcombine.high %v348, %v348
        %v390 = vunpack.c.l.s4 1983009808
        %v391 = vunpack.c.0.s8 %v390
        %v392 = vlaneseq
        %v393 = vshrl.u32 %v392, 7
        %v394 = vsub.s32 %v391, %v393
        %v395 = vrot.slane %v348, %v394
        %v397 = vunpack.c.l.s4 1983009808
        %v398 = vunpack.c.0.s8 %v397
        %v399 = vlaneseq
        %v400 = vshrl.u32 %v399, 7
        %v401 = vsub.s32 %v398, %v400
        %v402 = vrot.slane %v388, %v401
        %v403 = vcombine.high %v395, %v395
        %v444 = vunpack.c.l.b16 %v349
        %v445 = vunpack.c.l.b16 %v350
        %v446 = vunpack.c.l.b16 %v351
        %v447 = vunpack.c.l.b16 %v352
        %v448 = vunpack.c.l.b16 %v353
        %v449 = vunpack.c.l.b16 %v354
        %v450 = vunpack.c.l.b16 %v355
        %v451 = vunpack.c.l.b16 %v356
        %v452 = vunpack.c.l.b16 %v357
        %v453 = vunpack.c.l.b16 %v358
        %v454 = vunpack.c.l.b16 %v359
        %v455 = vunpack.c.l.b16 %v360
        %v456 = vunpack.c.l.b16 %v361
        %v457 = vunpack.c.l.b16 %v362
        %v458 = vunpack.c.l.b16 %v363
        %v459 = vunpack.c.l.b16 %v364
        %v460 = vunpack.c.l.b16 %v365
        %v461 = vunpack.c.l.b16 %v366
        %v462 = vunpack.c.l.b16 %v367
        %v463 = vunpack.c.l.b16 %v368
        %v464 = vunpack.c.l.b16 %v369
        %v465 = vunpack.c.l.b16 %v370
        %v466 = vunpack.c.l.b16 %v371
        %v467 = vunpack.c.l.b16 %v372
        %v468 = vunpack.c.l.b16 %v373
        %v469 = vunpack.c.l.b16 %v374
        %v470 = vunpack.c.l.b16 %v375
        %v471 = vunpack.c.l.b16 %v376
        %v472 = vunpack.c.l.b16 %v377
        %v473 = vunpack.c.l.b16 %v378
        %v474 = vunpack.c.l.b16 %v379
        %v475 = vunpack.c.l.b16 %v380
        %v476 = vunpack.c.l.b16 %v381
        %v477 = vunpack.c.l.b16 %v382
        %v478 = vunpack.c.l.b16 %v383
        %v479 = vunpack.c.l.b16 %v384
        %v480 = vunpack.c.l.b16 %v385
        %v481 = vunpack.c.l.b16 %v386
        %v482 = vpack.c.b16 %v445, %v444
        %v483 = vpack.c.b16 %v447, %v446
        %v484 = vpack.c.b16 %v449, %v448
        %v485 = vpack.c.b16 %v451, %v450
        %v486 = vpack.c.b16 %v453, %v452
        %v487 = vpack.c.b16 %v455, %v454
        %v488 = vpack.c.b16 %v457, %v456
        %v489 = vpack.c.b16 %v459, %v458
        %v490 = vpack.c.b16 %v461, %v460
        %v491 = vpack.c.b16 %v463, %v462
        %v492 = vpack.c.b16 %v465, %v464
        %v493 = vpack.c.b16 %v467, %v466
        %v494 = vpack.c.b16 %v469, %v468
        %v495 = vpack.c.b16 %v471, %v470
        %v496 = vpack.c.b16 %v473, %v472
        %v497 = vpack.c.b16 %v475, %v474
        %v498 = vpack.c.b16 %v477, %v476
        %v499 = vpack.c.b16 %v479, %v478
        %v500 = vpack.c.b16 %v481, %v480
        %vm519 = vcmask 359424
        %v521 = vsel %vm519, %v402, 0
        %vm523 = vcmask 1045504
        %v525 = vsel %vm523, %v500, 0
        %527 = vmatprep.subr.bf16.mxu0 0
        %528 = vmatpush1.bf16.msra.mxu0 %v482
        %529 = vmatprep.subr.bf16.mxu0 0
        %530 = vmatpush1.bf16.msra.mxu0 %v483
        %531 = vmatprep.subr.bf16.mxu0 0
        %532 = vmatpush1.bf16.msra.mxu0 %v484
        %533 = vmatprep.subr.bf16.mxu0 0
        %534 = vmatpush1.bf16.msra.mxu0 %v485
        %535 = vmatprep.subr.bf16.mxu0 0
        %536 = vmatpush1.bf16.msra.mxu0 %v486
        %537 = vmatprep.subr.bf16.mxu0 0
        %538 = vmatpush1.bf16.msra.mxu0 %v487
        %539 = vmatprep.subr.bf16.mxu0 0
        %540 = vmatpush1.bf16.msra.mxu0 %v488
        %541 = vmatprep.subr.bf16.mxu0 0
        %542 = vmatpush1.bf16.msra.mxu0 %v489
        %543 = vmatprep.subr.bf16.mxu0 0
        %544 = vmatpush1.bf16.msra.mxu0 %v490
        %545 = vmatprep.subr.bf16.mxu0 0
        %546 = vmatpush1.bf16.msra.mxu0 %v491
        %547 = vmatprep.subr.bf16.mxu0 0
        %548 = vmatpush1.bf16.msra.mxu0 %v492
        %549 = vmatprep.subr.bf16.mxu0 0
        %550 = vmatpush1.bf16.msra.mxu0 %v493
        %551 = vmatprep.subr.bf16.mxu0 0
        %552 = vmatpush1.bf16.msra.mxu0 %v494
        %553 = vmatprep.subr.bf16.mxu0 0
        %554 = vmatpush1.bf16.msra.mxu0 %v495
        %555 = vmatprep.subr.bf16.mxu0 0
        %556 = vmatpush1.bf16.msra.mxu0 %v496
        %557 = vmatprep.subr.bf16.mxu0 0
        %558 = vmatpush1.bf16.msra.mxu0 %v497
        %559 = vmatprep.mubr.bf16.mxu0 %v403
        %560 = vmatmul.mubr.bf16.gmra.mrb[0].mxu0 %v395
        %v561 = vpop.f32.mrb[0].mxu0
        %v562 = vadd.f32 0.0, %v561
        %v563 = vpop.f32.mrb[0].mxu0
        %v564 = vpop.f32.mrb[0].mxu0
        %v565 = vpop.f32.mrb[0].mxu0
        %566 = vdwg.mxu0
        %567 = vmatprep.subr.bf16.mxu0 0
        %568 = vmatpush1.bf16.msra.mxu0 %v498
        %569 = vmatprep.subr.bf16.mxu0 0
        %570 = vmatpush1.bf16.msra.mxu0 %v499
        %571 = vmatprep.subr.bf16.mxu0 0
        %572 = vmatpush1.bf16.msra.mxu0 %v525
        %573 = vmatprep.subr.bf16.mxu0 0
        %574 = vmatpush1.bf16.msra.mxu0 0
        %575 = vmatprep.subr.bf16.mxu0 0
        %576 = vmatpush1.bf16.msra.mxu0 0
        %577 = vmatprep.subr.bf16.mxu0 0
        %578 = vmatpush1.bf16.msra.mxu0 0
        %579 = vmatprep.subr.bf16.mxu0 0
        %580 = vmatpush1.bf16.msra.mxu0 0
        %581 = vmatprep.subr.bf16.mxu0 0
        %582 = vmatpush1.bf16.msra.mxu0 0
        %583 = vmatprep.subr.bf16.mxu0 0
        %584 = vmatpush1.bf16.msra.mxu0 0
        %585 = vmatprep.subr.bf16.mxu0 0
        %586 = vmatpush1.bf16.msra.mxu0 0
        %587 = vmatprep.subr.bf16.mxu0 0
        %588 = vmatpush1.bf16.msra.mxu0 0
        %589 = vmatprep.subr.bf16.mxu0 0
        %590 = vmatpush1.bf16.msra.mxu0 0
        %591 = vmatprep.subr.bf16.mxu0 0
        %592 = vmatpush1.bf16.msra.mxu0 0
        %593 = vmatprep.subr.bf16.mxu0 0
        %594 = vmatpush1.bf16.msra.mxu0 0
        %595 = vmatprep.subr.bf16.mxu0 0
        %596 = vmatpush1.bf16.msra.mxu0 0
        %597 = vmatprep.subr.bf16.mxu0 0
        %598 = vmatpush1.bf16.msra.mxu0 0
        %599 = vmatprep.mubr.bf16.mxu0 0
        %600 = vmatmul.mubr.bf16.gmra.mrb[0].mxu0 %v521
        %v601 = vpop.f32.mrb[0].mxu0
        %v602 = vadd.f32 %v562, %v601
        %v603 = vpop.f32.mrb[0].mxu0
        %v604 = vpop.f32.mrb[0].mxu0
        %v605 = vpop.f32.mrb[0].mxu0
        %606 = vdwg.mxu0
        %p607 = scmp.eq.s32.totalorder %s21, 0
        // Predicated region
        $region70: #{tpu_custom_call.1} parent=64 // pred_check
          %p608 = pneg %p607
        $region71: #{tpu_custom_call.1} parent=64 // pred_check_branch
          %610 = sbr.rel (%p608) target = $region73
        $region72: #{tpu_custom_call.1} parent=64 // pred_region
          %611 = vst [vmem:[%s346] sm:$0xf] %v602
        $region73: #{tpu_custom_call.1} parent=64 // pred_fallthru
          _
        %p612 = scmp.eq.s32.totalorder %s21, 1
        // Predicated region
        $region74: #{tpu_custom_call.1} parent=64 // pred_check
          %p613 = pneg %p612
        $region75: #{tpu_custom_call.1} parent=64 // pred_check_branch
          %615 = sbr.rel (%p613) target = $region77
        $region76: #{tpu_custom_call.1} parent=64 // pred_region
          %616 = vst [vmem:[%s346 + $0x4] sm:$0xf] %v602
        $region77: #{tpu_custom_call.1} parent=64 // pred_fallthru
          _
        %p617 = scmp.eq.s32.totalorder %s21, 2
        // Predicated region
        $region78: #{tpu_custom_call.1} parent=64 // pred_check
          %p618 = pneg %p617
        $region79: #{tpu_custom_call.1} parent=64 // pred_check_branch
          %620 = sbr.rel (%p618) target = $region81
        $region80: #{tpu_custom_call.1} parent=64 // pred_region
          %621 = vst [vmem:[%s346 + $0x8] sm:$0xf] %v602
        $region81: #{tpu_custom_call.1} parent=64 // pred_fallthru
          _
        %p622 = scmp.eq.s32.totalorder %s21, 3
        // Predicated region
        $region82: #{tpu_custom_call.1} parent=64 // pred_check
          %p623 = pneg %p622
        $region83: #{tpu_custom_call.1} parent=64 // pred_check_branch
          %625 = sbr.rel (%p623) target = $region85
        $region84: #{tpu_custom_call.1} parent=64 // pred_region
          %626 = vst [vmem:[%s346 + $0xc] sm:$0xf] %v602
          %v627 = vld [vmem:[%s346] sm:$0xff]
          %v628 = vld [vmem:[%s346 + $0x8] sm:$0xff]
          %v631 = vcombine.high %v627, %v627
          %v632 = vcombine.high %v628, %v628
          %vm635 = vcmask 1043456
          %v636 = vsel %vm635, %v627, 0.0
          %v637 = vsel %vm635, %v631, 0.0
          %v638 = vadd.f32 %v636, %v637
          %v639 = vsel %vm635, %v628, 0.0
          %v640 = vadd.f32 %v638, %v639
          %v641 = vsel %vm635, %v632, 0.0
          %v642 = vadd.f32 %v640, %v641
          %643 = vadd.xlane.f32.xlu0 %v642
          %v644 = vpop.xlane.xlu0 %643
          %v645 = vrcp.pop 512.0
          %v646 = vmul.f32 %v644, %v645
          %v649 = vunpack.c.l.s4 839922192
          %v650 = vunpack.c.0.s8 %v649
          %v651 = vlaneseq
          %v652 = vshrl.u32 %v651, 7
          %v653 = vsub.s32 %v650, %v652
          %v654 = vrot.slane %v646, %v653
          %v656 = vsub.f32 %v627, %v654
          %v657 = vsub.f32 %v628, %v654
          %v658 = vmul.f32 %v656, %v656
          %v659 = vmul.f32 %v657, %v657
          %v662 = vcombine.high %v658, %v658
          %v663 = vcombine.high %v659, %v659
          %v666 = vsel %vm635, %v658, 0.0
          %v667 = vsel %vm635, %v662, 0.0
          %v668 = vadd.f32 %v666, %v667
          %v669 = vsel %vm635, %v659, 0.0
          %v670 = vadd.f32 %v668, %v669
          %v671 = vsel %vm635, %v663, 0.0
          %v672 = vadd.f32 %v670, %v671
          %673 = vadd.xlane.f32.xlu0 %v672
          %v674 = vpop.xlane.xlu0 %673
          %v675 = vmul.f32 %v674, %v645
          %v676 = vadd.f32 %v675, 1e-05
          %v677 = vrsqrt.pop %v676
          %v680 = vunpack.c.l.s4 839922192
          %v681 = vunpack.c.0.s8 %v680
          %v682 = vlaneseq
          %v683 = vshrl.u32 %v682, 7
          %v684 = vsub.s32 %v681, %v683
          %v685 = vrot.slane %v677, %v684
          %v687 = vmul.f32 %v656, %v685
          %v688 = vmul.f32 %v657, %v685
          %vm689 = vcmp.ge.f32.partialorder %v687, 0.0
          %vm690 = vcmp.ge.f32.partialorder %v688, 0.0
          %v691 = vmul.f32 %v687, 0.1
          %v692 = vmul.f32 %v688, 0.1
          %v693 = vsel %vm689, %v687, %v691
          %v694 = vsel %vm690, %v688, %v692
          %695 = vst [vmem:[%s346] sm:$0xff] %v693
          %696 = vst [vmem:[%s346 + $0x8] sm:$0xff] %v694
        $region85: #{tpu_custom_call.1} parent=64 // pred_fallthru
          _
        %s697 = sand.u32 %s85, 1
        %s698 = scalar_lea.sflag [#allocation4], %s697
        %s699 = sand.u32 %s85, 1
        %s700 = smul.addr %s699, 16
        %s701 = scalar_lea.vmem [#allocation3], %s700
        // Predicated region
        $region86: #{tpu_custom_call.1} parent=64 // pred_check
          %p702 = pneg %p95
        $region87: #{tpu_custom_call.1} parent=64 // pred_check_branch
          %704 = sbr.rel (%p702) target = $region89
        $region88: #{tpu_custom_call.1} parent=64 // pred_region
          %s706 = ssub.s32 256, 256
          %707 = vsyncadd %s698, %s706
          %s708 = smul.addr %s20, 4
          %s709 = smul.addr %s708, 64
          %s710 = scalar_lea.hbm %s2, %s709
          %s712 = sshll.u32 %s701, 4
          %s713 = int_to_ptr.vmem [resolvable:$true] %s712
          %715 = dma.vmem_to_hbm [thread:$0]  %s713, 256, %s710, %s698
        $region89: #{tpu_custom_call.1} parent=64 // pred_fallthru
          _
      $region65: #{tpu_custom_call.1} parent=5 // pred_fallthru
        _
      %p716 = scmp.le.s32.totalorder 2, %s11
      // Predicated region
      $region90: #{tpu_custom_call.1} parent=5 // pred_check
        %p717 = pneg %p716
      $region91: #{tpu_custom_call.1} parent=5 // pred_check_branch
        %719 = sbr.rel (%p717) target = $region93
      $region92: #{tpu_custom_call.1} parent=5 // pred_region
        %s720 = ssub.s32 %s11, 2
        // Predicated region
        $region94: #{tpu_custom_call.1} parent=92 // pred_check
          %p721 = pneg %p101
        $region95: #{tpu_custom_call.1} parent=92 // pred_check_branch
          %723 = sbr.rel (%p721) target = $region97
        $region96: #{tpu_custom_call.1} parent=92 // pred_region
          %s724 = sand.u32 %s86, 1
          %s725 = scalar_lea.sflag [#allocation4], %s724
          %s726 = sand.u32 %s86, 1
          %s727 = smul.addr %s726, 16
          %s728 = scalar_lea.vmem [#allocation3], %s727
          %729 = dma.done %s725, 256
        $region97: #{tpu_custom_call.1} parent=92 // pred_fallthru
          _
      $region93: #{tpu_custom_call.1} parent=5 // pred_fallthru
        _
    $region6: #{tpu_custom_call.1} parent=1 // loop_footer
      %s15 = sadd.s32 1, %s11
    $region7: #{tpu_custom_call.1} parent=1 // loop_footer_branch
      %10 = sbr.rel target = $region3
    $region8: #{tpu_custom_call.1} parent=1 // loop_exit
      _
    %730 = vsyncpa [#allocation4], 1
    %s731 = scalar_lea.sflag [#allocation4], 1
    %732 = vsyncpa %s731, 1

</llo_original>
